<compile_context>
chip_gen: v7x
topology: tpu7x:2x2x1
jax: 0.10.0
libtpu: 0.0.40
codegen_flags: <defaults>
</compile_context>

<pallas_src>
import functools

import jax
import jax.numpy as jnp
from jax.experimental import pallas as pl
from jax.experimental.pallas import tpu as pltpu


def _make_kernel(weights, n, bn, h, w):
    """One grid step processes `bn` images of a batch of `n`; all shapes are static."""
    weights = tuple(float(x) for x in weights)
    num_scales = len(weights)

    def kernel(gener_ref, ori_ref, *rest):
        b_refs = rest[:num_scales]           # lane-pool operators (w_s, w_s//2), bf16
        loss_ref = rest[num_scales]          # (1, 1, 128) f32 output block
        zs_ref = rest[num_scales + 1]        # (bn*h, w//2) f32 scratch, reused every scale

        # Per-image difference in f32 (pooling is linear: pool(g) - pool(o) == pool(g - o)).
        d = gener_ref[...].astype(jnp.float32) - ori_ref[...].astype(jnp.float32)
        # Stack images along sublanes. Row pairs never straddle an image because every image
        # contributes an even row count at every scale (h % 2**num_scales == 0).
        z = d.reshape(bn * h, w)

        m, w_cur = bn * h, w
        loss = jnp.float32(0.0)
        for s, scale_w in enumerate(weights):      # static unroll; shapes shrink 2x per scale
            m_half, w_half = m // 2, w_cur // 2

            # Lane (column) pool on the MXU: (m, w_cur) @ (w_cur, w_half), bf16 0/0.5 operator
            # upcast in-kernel so numerics match the f32 reference exactly.
            b = b_refs[s][...].astype(jnp.float32)
            zc = jnp.dot(z, b, preferred_element_type=jnp.float32)    # (m, w_half)

            # Sublane (row) pool on the VPU: strided loads of even/odd rows from the scratch.
            zs_ref[0:m, 0:w_half] = zc
            even = zs_ref[pl.ds(0, m_half, stride=2), pl.ds(0, w_half)]
            odd = zs_ref[pl.ds(1, m_half, stride=2), pl.ds(0, w_half)]
            z = (even + odd) * jnp.float32(0.5)                       # (m_half, w_half)

            m, w_cur = m_half, w_half
            h_s = m // bn                                             # per-image pooled height
            # Fold the scale weight and the PyTorch (N * H_s * W_s) denominator together.
            coeff = scale_w / float(n * h_s * w_cur)
            loss = loss + jnp.float32(coeff) * jnp.sum(jnp.abs(z))

        # Lane-dense partial-loss store; the tiny batch reduction happens outside the kernel.
        loss_ref[...] = jnp.broadcast_to(loss, loss_ref.shape)

    return kernel


@functools.partial(jax.jit, static_argnames=("weights",))
def image_recover_loss(generP, oriP, weights):
    """generP, oriP: [N, 1, H, W] arrays (NCHW). Returns scalar f32 loss."""
    n, c, h, w = generP.shape
    assert c == 1, "module concatenates on channels and indexes [:,0]/[:,1] -> C must be 1"
    num_scales = len(weights)
    assert num_scales >= 1
    # TODO(synk): PyTorch AvgPool2d silently floors odd spatial sizes; we require exact
    # divisibility and fail loudly instead.
    assert h % (2 ** num_scales) == 0 and w % (2 ** num_scales) == 0

    gener = generP.reshape(n, h, w)          # keep native dtype in HBM
    ori = oriP.reshape(n, h, w)
    itemsize = jnp.dtype(generP.dtype).itemsize

    # ---- how many images per grid step (amortize per-step overhead, bound VMEM) ----
    per_image = (2 * 2 * h * w * itemsize        # two inputs, double-buffered
                 + h * w * 4                     # f32 diff
                 + 3 * h * (w // 2) * 4)         # scratch + first-scale intermediates
    budget = 12 * 2 ** 20                        # per-step tile budget, safe on v5e/v6e/v7x
    bn_cap = max(1, budget // max(per_image, 1))
    if n >= 2:
        bn_cap = min(bn_cap, n // 2)             # keep >= 2 parallel steps for v7x's 2 TCs
    bn = 1
    for d in range(1, n + 1):
        if n % d == 0 and d <= bn_cap:
            bn = d
    steps = n // bn
    # TODO(synk): for very large H*W (per-step footprint > VMEM even at bn=1) add a row-tile
    # grid axis (tile height a multiple of 2**num_scales, marked "arbitrary") instead.

    # ---- host-side 2x2 column-averaging operators per scale (bf16: 0.0 / 0.5 exact) ----
    mats = []
    w_s = w
    for _ in range(num_scales):
        b = ((jnp.arange(w_s)[:, None] // 2) == jnp.arange(w_s // 2)[None, :])
        mats.append((b.astype(jnp.float32) * 0.5).astype(jnp.bfloat16))   # (w_s, w_s//2)
        w_s //= 2

    in_specs = [
        pl.BlockSpec((bn, h, w), lambda i: (i, 0, 0)),
        pl.BlockSpec((bn, h, w), lambda i: (i, 0, 0)),
    ]
    for m in mats:
        in_specs.append(pl.BlockSpec(m.shape, lambda i: (0, 0)))  # replicated constants

    # ---- advisory cost estimate (re-derived: row pool is now O(H*W) VPU adds) ----
    flops = 0
    h_s, w_s = h, w
    for _ in range(num_scales):
        flops += 2 * n * h_s * w_s * (w_s // 2)      # lane pool matmul Z @ B
        flops += 2 * n * (h_s // 2) * (w_s // 2)     # VPU row-pair add + scale
        flops += 2 * n * (h_s // 2) * (w_s // 2)     # abs + reduction
        h_s //= 2
        w_s //= 2
    mat_bytes = sum(int(m.size) * 2 for m in mats)   # bf16 constants
    bytes_accessed = 2 * n * h * w * itemsize + mat_bytes + steps * 128 * 4
    cost = pl.CostEstimate(flops=int(flops), transcendentals=0,
                           bytes_accessed=int(bytes_accessed))

    # ---- VMEM budget from the real per-step footprint (no 32 MiB under-provision clamp) ----
    per_step = (2 * 2 * bn * h * w * itemsize        # two inputs, double-buffered
                + bn * h * w * 4                     # f32 diff
                + 3 * bn * h * (w // 2) * 4          # scratch + first-scale intermediates
                + 2 * mat_bytes                      # pool operators (double-buffered)
                + 2 * 128 * 4)                       # output block
    vmem_limit = int(min(max(2 * per_step, 16 * 2 ** 20), 64 * 2 ** 20))

    partial = pl.pallas_call(
        _make_kernel(weights, n, bn, h, w),
        out_shape=jax.ShapeDtypeStruct((steps, 1, 128), jnp.float32),
        grid=(steps,),
        in_specs=in_specs,
        out_specs=pl.BlockSpec((1, 1, 128), lambda i: (i, 0, 0)),
        scratch_shapes=[pltpu.VMEM((bn * h, w // 2), jnp.float32)],
        compiler_params=pltpu.CompilerParams(
            dimension_semantics=("parallel",),
            vmem_limit_bytes=vmem_limit,
        ),
        cost_estimate=cost,
    )(gener, ori, *mats)

    # Tiny XLA reduction of the per-step partial losses.
    return jnp.sum(partial[:, 0, 0])


def _reference_loss(generP, oriP, weights):
    """Pure-JAX mirror of the PyTorch forward (for verification)."""
    z = jnp.concatenate((generP, oriP), axis=1)  # [N, 2, H, W]
    loss = jnp.float32(0.0)
    for scale_w in weights:
        nb, cb, hb, wb = z.shape
        z = z.reshape(nb, cb, hb // 2, 2, wb // 2, 2).mean(axis=(3, 5))
        diff = jnp.abs(z[:, 0, ...] - z[:, 1, ...])
        loss = loss + scale_w * jnp.sum(diff) / (z.shape[0] * z.shape[2] * z.shape[3])
    return loss


if __name__ == "__main__":
    # Deterministic synthetic "parameters": the loss-per-scale weights from __init__.
    loss_weight_per_scale = (0.6, 0.3, 0.1)

    key = jax.random.PRNGKey(0)
    k1, k2 = jax.random.split(key)
    N, C, H, W = 2, 1, 16, 16
    generP = jax.random.normal(k1, (N, C, H, W), dtype=jnp.float32)
    oriP = jax.random.normal(k2, (N, C, H, W), dtype=jnp.float32)

    out = jax.block_until_ready(image_recover_loss(generP, oriP, loss_weight_per_scale))
    ref = jax.block_until_ready(_reference_loss(generP, oriP, loss_weight_per_scale))
    assert jnp.allclose(out, ref, rtol=1e-5, atol=1e-5), (out, ref)

    print("KERNEL_OK")
</pallas_src>

<mosaic_0001>
module attributes {stable_mosaic.version = 11 : i64} {
  func.func @kernel(%arg0: i32, %arg1: memref<1x16x16xf32, #tpu.memory_space<vmem>>, %arg2: memref<1x16x16xf32, #tpu.memory_space<vmem>>, %arg3: memref<16x8xbf16, #tpu.memory_space<vmem>>, %arg4: memref<8x4xbf16, #tpu.memory_space<vmem>>, %arg5: memref<4x2xbf16, #tpu.memory_space<vmem>>, %arg6: memref<1x1x128xf32, #tpu.memory_space<vmem>>, %arg7: memref<16x8xf32, #tpu.memory_space<vmem>>) attributes {dimension_semantics = [#tpu.dimension_semantics<parallel>], iteration_bounds = array<i64: 2>, scalar_prefetch = 0 : i64, scratch_operands = 1 : i64, tpu.core_type = #tpu.core_type<tc>, window_params = [{transform_indices = @transform_0, window_bounds = array<i64: 1, 16, 16>}, {transform_indices = @transform_1, window_bounds = array<i64: 1, 16, 16>}, {pipeline_mode = #tpu.pipeline_mode<synchronous>, transform_indices = @transform_2, window_bounds = array<i64: 16, 8>}, {pipeline_mode = #tpu.pipeline_mode<synchronous>, transform_indices = @transform_3, window_bounds = array<i64: 8, 4>}, {pipeline_mode = #tpu.pipeline_mode<synchronous>, transform_indices = @transform_4, window_bounds = array<i64: 4, 2>}, {transform_indices = @transform_5, window_bounds = array<i64: 1, 1, 128>}]} {
    %c0 = arith.constant 0 : index
    %c0_0 = arith.constant 0 : index
    %c0_1 = arith.constant 0 : index
    %0 = vector.load %arg1[%c0, %c0_0, %c0_1] : memref<1x16x16xf32, #tpu.memory_space<vmem>>, vector<1x16x16xf32>
    %c0_2 = arith.constant 0 : index
    %c0_3 = arith.constant 0 : index
    %c0_4 = arith.constant 0 : index
    %1 = vector.load %arg2[%c0_2, %c0_3, %c0_4] : memref<1x16x16xf32, #tpu.memory_space<vmem>>, vector<1x16x16xf32>
    %2 = arith.subf %0, %1 : vector<1x16x16xf32>
    %3 = vector.shape_cast %2 : vector<1x16x16xf32> to vector<16x16xf32>
    %c0_5 = arith.constant 0 : index
    %c0_6 = arith.constant 0 : index
    %4 = vector.load %arg3[%c0_5, %c0_6] : memref<16x8xbf16, #tpu.memory_space<vmem>>, vector<16x8xbf16>
    %5 = arith.extf %4 : vector<16x8xbf16> to vector<16x8xf32>
    %cst = arith.constant dense<0.000000e+00> : vector<16x8xf32>
    %6 = tpu.matmul %3, %5, %cst {dimension_numbers = #tpu.dot_dimension_numbers<[1], [0], [0], [1], [0, 0, 1, 1], [], []>} : vector<16x16xf32>, vector<16x8xf32>, vector<16x8xf32> -> vector<16x8xf32>
    %c0_7 = arith.constant 0 : index
    %c0_8 = arith.constant 0 : index
    %7 = vector.load %arg7[%c0_7, %c0_8] : memref<16x8xf32, #tpu.memory_space<vmem>>, vector<16x8xf32>
    tpu.vector_store %arg7[%c0_7, %c0_8], %6 {strides = array<i32>} : memref<16x8xf32, #tpu.memory_space<vmem>>, vector<16x8xf32>,
    %c0_9 = arith.constant 0 : index
    %c0_10 = arith.constant 0 : index
    %8 = tpu.strided_load %arg7[%c0_9, %c0_10] {strides = array<i32: 2, 1>} : memref<16x8xf32, #tpu.memory_space<vmem>>, vector<8x8xf32>
    %c1 = arith.constant 1 : index
    %c0_11 = arith.constant 0 : index
    %9 = tpu.strided_load %arg7[%c1, %c0_11] {strides = array<i32: 2, 1>} : memref<16x8xf32, #tpu.memory_space<vmem>>, vector<8x8xf32>
    %10 = arith.addf %8, %9 : vector<8x8xf32>
    %cst_12 = arith.constant 5.000000e-01 : f32
    %11 = vector.broadcast %cst_12 : f32 to vector<8x8xf32>
    %12 = arith.mulf %10, %11 : vector<8x8xf32>
    %13 = math.absf %12 : vector<8x8xf32>
    %14 = vector.shape_cast %13 : vector<8x8xf32> to vector<1x8x8xf32>
    %cst_13 = arith.constant dense<0.000000e+00> : vector<1xf32>
    %15 = vector.multi_reduction <add>, %14, %cst_13 [1, 2] : vector<1x8x8xf32> to vector<1xf32>
    %16 = vector.shape_cast %15 : vector<1xf32> to vector<1x1x1xf32>
    %17 = vector.extract %16[0, 0, 0] : f32 from vector<1x1x1xf32>
    %cst_14 = arith.constant 4.687500e-03 : f32
    %18 = arith.mulf %cst_14, %17 : f32
    %cst_15 = arith.constant 0.000000e+00 : f32
    %19 = arith.addf %cst_15, %18 : f32
    %c0_16 = arith.constant 0 : index
    %c0_17 = arith.constant 0 : index
    %20 = vector.load %arg4[%c0_16, %c0_17] : memref<8x4xbf16, #tpu.memory_space<vmem>>, vector<8x4xbf16>
    %21 = arith.extf %20 : vector<8x4xbf16> to vector<8x4xf32>
    %cst_18 = arith.constant dense<0.000000e+00> : vector<8x4xf32>
    %22 = tpu.matmul %12, %21, %cst_18 {dimension_numbers = #tpu.dot_dimension_numbers<[1], [0], [0], [1], [0, 0, 1, 1], [], []>} : vector<8x8xf32>, vector<8x4xf32>, vector<8x4xf32> -> vector<8x4xf32>
    %c0_19 = arith.constant 0 : index
    %c0_20 = arith.constant 0 : index
    %23 = vector.load %arg7[%c0_19, %c0_20] : memref<16x8xf32, #tpu.memory_space<vmem>>, vector<8x4xf32>
    tpu.vector_store %arg7[%c0_19, %c0_20], %22 {strides = array<i32>} : memref<16x8xf32, #tpu.memory_space<vmem>>, vector<8x4xf32>,
    %c0_21 = arith.constant 0 : index
    %c0_22 = arith.constant 0 : index
    %24 = tpu.strided_load %arg7[%c0_21, %c0_22] {strides = array<i32: 2, 1>} : memref<16x8xf32, #tpu.memory_space<vmem>>, vector<4x4xf32>
    %c1_23 = arith.constant 1 : index
    %c0_24 = arith.constant 0 : index
    %25 = tpu.strided_load %arg7[%c1_23, %c0_24] {strides = array<i32: 2, 1>} : memref<16x8xf32, #tpu.memory_space<vmem>>, vector<4x4xf32>
    %26 = arith.addf %24, %25 : vector<4x4xf32>
    %cst_25 = arith.constant 5.000000e-01 : f32
    %27 = vector.broadcast %cst_25 : f32 to vector<4x4xf32>
    %28 = arith.mulf %26, %27 : vector<4x4xf32>
    %29 = math.absf %28 : vector<4x4xf32>
    %30 = vector.shape_cast %29 : vector<4x4xf32> to vector<1x4x4xf32>
    %cst_26 = arith.constant dense<0.000000e+00> : vector<1xf32>
    %31 = vector.multi_reduction <add>, %30, %cst_26 [1, 2] : vector<1x4x4xf32> to vector<1xf32>
    %32 = vector.shape_cast %31 : vector<1xf32> to vector<1x1x1xf32>
    %33 = vector.extract %32[0, 0, 0] : f32 from vector<1x1x1xf32>
    %cst_27 = arith.constant 9.375000e-03 : f32
    %34 = arith.mulf %cst_27, %33 : f32
    %35 = arith.addf %19, %34 : f32
    %c0_28 = arith.constant 0 : index
    %c0_29 = arith.constant 0 : index
    %36 = vector.load %arg5[%c0_28, %c0_29] : memref<4x2xbf16, #tpu.memory_space<vmem>>, vector<4x2xbf16>
    %37 = arith.extf %36 : vector<4x2xbf16> to vector<4x2xf32>
    %cst_30 = arith.constant dense<0.000000e+00> : vector<4x2xf32>
    %38 = tpu.matmul %28, %37, %cst_30 {dimension_numbers = #tpu.dot_dimension_numbers<[1], [0], [0], [1], [0, 0, 1, 1], [], []>} : vector<4x4xf32>, vector<4x2xf32>, vector<4x2xf32> -> vector<4x2xf32>
    %c0_31 = arith.constant 0 : index
    %c0_32 = arith.constant 0 : index
    %39 = vector.load %arg7[%c0_31, %c0_32] : memref<16x8xf32, #tpu.memory_space<vmem>>, vector<4x2xf32>
    tpu.vector_store %arg7[%c0_31, %c0_32], %38 {strides = array<i32>} : memref<16x8xf32, #tpu.memory_space<vmem>>, vector<4x2xf32>,
    %c0_33 = arith.constant 0 : index
    %c0_34 = arith.constant 0 : index
    %40 = tpu.strided_load %arg7[%c0_33, %c0_34] {strides = array<i32: 2, 1>} : memref<16x8xf32, #tpu.memory_space<vmem>>, vector<2x2xf32>
    %c1_35 = arith.constant 1 : index
    %c0_36 = arith.constant 0 : index
    %41 = tpu.strided_load %arg7[%c1_35, %c0_36] {strides = array<i32: 2, 1>} : memref<16x8xf32, #tpu.memory_space<vmem>>, vector<2x2xf32>
    %42 = arith.addf %40, %41 : vector<2x2xf32>
    %cst_37 = arith.constant 5.000000e-01 : f32
    %43 = vector.broadcast %cst_37 : f32 to vector<2x2xf32>
    %44 = arith.mulf %42, %43 : vector<2x2xf32>
    %45 = math.absf %44 : vector<2x2xf32>
    %46 = vector.shape_cast %45 : vector<2x2xf32> to vector<1x2x2xf32>
    %cst_38 = arith.constant dense<0.000000e+00> : vector<1xf32>
    %47 = vector.multi_reduction <add>, %46, %cst_38 [1, 2] : vector<1x2x2xf32> to vector<1xf32>
    %48 = vector.shape_cast %47 : vector<1xf32> to vector<1x1x1xf32>
    %49 = vector.extract %48[0, 0, 0] : f32 from vector<1x1x1xf32>
    %cst_39 = arith.constant 1.250000e-02 : f32
    %50 = arith.mulf %cst_39, %49 : f32
    %51 = arith.addf %35, %50 : f32
    %52 = vector.broadcast %51 : f32 to vector<1x1x128xf32>
    %c0_40 = arith.constant 0 : index
    %c0_41 = arith.constant 0 : index
    %c0_42 = arith.constant 0 : index
    %53 = vector.load %arg6[%c0_40, %c0_41, %c0_42] : memref<1x1x128xf32, #tpu.memory_space<vmem>>, vector<1x1x128xf32>
    tpu.vector_store %arg6[%c0_40, %c0_41, %c0_42], %52 {strides = array<i32>} : memref<1x1x128xf32, #tpu.memory_space<vmem>>, vector<1x1x128xf32>,
    return
  }
  func.func @transform_0(%arg0: i32) -> (i32, i32, i32) {
    %c0_i32 = arith.constant 0 : i32
    %c0_i32_0 = arith.constant 0 : i32
    %c0_i32_1 = arith.constant 0 : i32
    return %arg0, %c0_i32, %c0_i32_0 : i32, i32, i32
  }
  func.func @transform_1(%arg0: i32) -> (i32, i32, i32) {
    %c0_i32 = arith.constant 0 : i32
    %c0_i32_0 = arith.constant 0 : i32
    %c0_i32_1 = arith.constant 0 : i32
    return %arg0, %c0_i32, %c0_i32_0 : i32, i32, i32
  }
  func.func @transform_2(%arg0: i32) -> (i32, i32) {
    %c0_i32 = arith.constant 0 : i32
    %c0_i32_0 = arith.constant 0 : i32
    %c0_i32_1 = arith.constant 0 : i32
    return %c0_i32, %c0_i32_0 : i32, i32
  }
  func.func @transform_3(%arg0: i32) -> (i32, i32) {
    %c0_i32 = arith.constant 0 : i32
    %c0_i32_0 = arith.constant 0 : i32
    %c0_i32_1 = arith.constant 0 : i32
    return %c0_i32, %c0_i32_0 : i32, i32
  }
  func.func @transform_4(%arg0: i32) -> (i32, i32) {
    %c0_i32 = arith.constant 0 : i32
    %c0_i32_0 = arith.constant 0 : i32
    %c0_i32_1 = arith.constant 0 : i32
    return %c0_i32, %c0_i32_0 : i32, i32
  }
  func.func @transform_5(%arg0: i32) -> (i32, i32, i32) {
    %c0_i32 = arith.constant 0 : i32
    %c0_i32_0 = arith.constant 0 : i32
    %c0_i32_1 = arith.constant 0 : i32
    return %arg0, %c0_i32, %c0_i32_0 : i32, i32, i32
  }
}

</mosaic_0001>

<llo_original>
// kernel: image_recover_loss.1
$region0: #{image_recover_loss.1}
  #allocation0 [shape = 'u32[]', space=smem, size = 0x4, offset = 0x4, fixed_abs, tag = 'smem constant byte address 0x4 - core index']
  #allocation1 [shape = 'u32[144,128]{1,0:T(1,128)}', space=vmem, size = 0x12000, scoped, tag = 'internal scratch']
  #allocation2 [shape = 'f32[16,8]{1,0:T(8,128)}', space=vmem, size = 0x2000, scoped, tag = 'scratch operand']
  %s0 = inlined_call_operand.vmem [shape: f32[2,16,16], index: 0, kind: input, shape index: {}]
  %s1 = inlined_call_operand.hbm [shape: f32[2,16,16], index: 1, kind: input, shape index: {}]
  %s2 = inlined_call_operand.vmem [shape: bf16[16,8], index: 2, kind: input, shape index: {}]
  %s3 = inlined_call_operand.vmem [shape: bf16[8,4], index: 3, kind: input, shape index: {}]
  %s4 = inlined_call_operand.vmem [shape: bf16[4,2], index: 4, kind: input, shape index: {}]
  %s5 = inlined_call_operand.vmem [shape: f32[2,1,128], index: 5, kind: output, shape index: {}]
  %s6 = sld [smem:[#allocation0]]
  $region57: #{image_recover_loss.1} parent=0
    _
  %s8 = ssub.s32 1, %s6
  %s9 = scalar_select 0, %s8, %s6
  $region1: #{image_recover_loss.1} parent=0
    #allocation3 [shape = 'u8[16384]{0}', space=vmem, size = 0x4000, scoped, tag = 'input window, operand 1']
    #allocation4 [shape = 's32[2]{0}', space=sflag, size = 0x8, scoped, tag = 'scoped memory for image_recover_loss.1']
    %10 = vsyncpa [#allocation4], 0
    %s11 = scalar_lea.sflag [#allocation4], 1
    %12 = vsyncpa %s11, 0
    loop: start=0, step=1, limit=4
    $region2: #{image_recover_loss.1} parent=1 // loop_pre_header
      _
    $region3: #{image_recover_loss.1} parent=1 // loop_header
      %s14 = sphi 0, %s18
      %p15 = scmp.ge.s32.totalorder %s14, 4
      %s24 = sphi 0, %s26
      %s27 = sphi 0, %s24
      %s28 = sphi 0, %s27
      %s44 = sphi 0, %s28
      %s50 = sphi 0, %s52
      %s53 = sphi 0, %s50
      %s54 = sphi 0, %s53
      %s70 = sphi 0, %s54
      %s74 = sphi 0, %s74
      %s76 = sphi 0, %s74
      %s77 = sphi 0, %s76
      %s91 = sphi 0, %s77
      %s95 = sphi 0, %s95
      %s97 = sphi 0, %s95
      %s98 = sphi 0, %s97
      %s112 = sphi 0, %s98
      %s116 = sphi 0, %s116
      %s118 = sphi 0, %s116
      %s119 = sphi 0, %s118
      %s133 = sphi 0, %s119
      %s139 = sphi 0, %s141
      %s142 = sphi 0, %s139
      %s143 = sphi 0, %s142
      %s159 = sphi 0, %s143
    $region4: #{image_recover_loss.1} parent=1 // loop_header_branch
      %17 = sbr.rel (%p15) target = $region8
    $region5: #{image_recover_loss.1} parent=1 // loop_body
      %s19 = ssub.s32 %s14, 1
      %s20 = ssub.s32 %s14, 2
      %s21 = sadd.s32 %s14, 1
      %s22 = ssub.s32 %s14, %s21
      %p23 = scmp.eq.s32.totalorder %s22, 0
      %s25 = sadd.s32 %s24, 1
      %s26 = scalar_select %p23, %s24, %s25
      %p29 = pneg %p23
      %p30 = scmp.eq.s32.totalorder %s14, 1
      %p31 = por %p29, %p30
      %p32 = scmp.ne.s32.totalorder %s24, %s27
      %p33 = scmp.eq.s32.totalorder %s14, 0
      %p34 = por %p32, %p33
      %p35 = scmp.ne.s32.totalorder %s24, %s27
      %p36 = scmp.eq.s32.totalorder %s19, 1
      %p37 = por %p35, %p36
      %p38 = scmp.ne.s32.totalorder %s27, %s28
      %p39 = scmp.eq.s32.totalorder %s19, 0
      %p40 = por %p38, %p39
      %p41 = scmp.ne.s32.totalorder %s27, %s28
      %p42 = scmp.eq.s32.totalorder %s20, 1
      %p43 = por %p41, %p42
      %p45 = scmp.ne.s32.totalorder %s28, %s44
      %p46 = scmp.eq.s32.totalorder %s20, 0
      %p47 = por %p45, %p46
      %s48 = ssub.s32 %s14, %s21
      %p49 = scmp.eq.s32.totalorder %s48, 0
      %s51 = sadd.s32 %s50, 1
      %s52 = scalar_select %p49, %s50, %s51
      %p55 = pneg %p49
      %p56 = scmp.eq.s32.totalorder %s14, 1
      %p57 = por %p55, %p56
      %p58 = scmp.ne.s32.totalorder %s50, %s53
      %p59 = scmp.eq.s32.totalorder %s14, 0
      %p60 = por %p58, %p59
      %p61 = scmp.ne.s32.totalorder %s50, %s53
      %p62 = scmp.eq.s32.totalorder %s19, 1
      %p63 = por %p61, %p62
      %p64 = scmp.ne.s32.totalorder %s53, %s54
      %p65 = scmp.eq.s32.totalorder %s19, 0
      %p66 = por %p64, %p65
      %p67 = scmp.ne.s32.totalorder %s53, %s54
      %p68 = scmp.eq.s32.totalorder %s20, 1
      %p69 = por %p67, %p68
      %p71 = scmp.ne.s32.totalorder %s54, %s70
      %p72 = scmp.eq.s32.totalorder %s20, 0
      %p73 = por %p71, %p72
      %s75 = sadd.s32 %s74, 1
      %p78 = scmp.eq.s32.totalorder %s14, 1
      %p79 = scmp.ne.s32.totalorder %s74, %s76
      %p80 = scmp.eq.s32.totalorder %s14, 0
      %p81 = por %p79, %p80
      %p82 = scmp.ne.s32.totalorder %s74, %s76
      %p83 = scmp.eq.s32.totalorder %s19, 1
      %p84 = por %p82, %p83
      %p85 = scmp.ne.s32.totalorder %s76, %s77
      %p86 = scmp.eq.s32.totalorder %s19, 0
      %p87 = por %p85, %p86
      %p88 = scmp.ne.s32.totalorder %s76, %s77
      %p89 = scmp.eq.s32.totalorder %s20, 1
      %p90 = por %p88, %p89
      %p92 = scmp.ne.s32.totalorder %s77, %s91
      %p93 = scmp.eq.s32.totalorder %s20, 0
      %p94 = por %p92, %p93
      %s96 = sadd.s32 %s95, 1
      %p99 = scmp.eq.s32.totalorder %s14, 1
      %p100 = scmp.ne.s32.totalorder %s95, %s97
      %p101 = scmp.eq.s32.totalorder %s14, 0
      %p102 = por %p100, %p101
      %p103 = scmp.ne.s32.totalorder %s95, %s97
      %p104 = scmp.eq.s32.totalorder %s19, 1
      %p105 = por %p103, %p104
      %p106 = scmp.ne.s32.totalorder %s97, %s98
      %p107 = scmp.eq.s32.totalorder %s19, 0
      %p108 = por %p106, %p107
      %p109 = scmp.ne.s32.totalorder %s97, %s98
      %p110 = scmp.eq.s32.totalorder %s20, 1
      %p111 = por %p109, %p110
      %p113 = scmp.ne.s32.totalorder %s98, %s112
      %p114 = scmp.eq.s32.totalorder %s20, 0
      %p115 = por %p113, %p114
      %s117 = sadd.s32 %s116, 1
      %p120 = scmp.eq.s32.totalorder %s14, 1
      %p121 = scmp.ne.s32.totalorder %s116, %s118
      %p122 = scmp.eq.s32.totalorder %s14, 0
      %p123 = por %p121, %p122
      %p124 = scmp.ne.s32.totalorder %s116, %s118
      %p125 = scmp.eq.s32.totalorder %s19, 1
      %p126 = por %p124, %p125
      %p127 = scmp.ne.s32.totalorder %s118, %s119
      %p128 = scmp.eq.s32.totalorder %s19, 0
      %p129 = por %p127, %p128
      %p130 = scmp.ne.s32.totalorder %s118, %s119
      %p131 = scmp.eq.s32.totalorder %s20, 1
      %p132 = por %p130, %p131
      %p134 = scmp.ne.s32.totalorder %s119, %s133
      %p135 = scmp.eq.s32.totalorder %s20, 0
      %p136 = por %p134, %p135
      %s137 = ssub.s32 %s14, %s21
      %p138 = scmp.eq.s32.totalorder %s137, 0
      %s140 = sadd.s32 %s139, 1
      %s141 = scalar_select %p138, %s139, %s140
      %p144 = pneg %p138
      %p145 = scmp.eq.s32.totalorder %s14, 1
      %p146 = por %p144, %p145
      %p147 = scmp.ne.s32.totalorder %s139, %s142
      %p148 = scmp.eq.s32.totalorder %s14, 0
      %p149 = por %p147, %p148
      %p150 = scmp.ne.s32.totalorder %s139, %s142
      %p151 = scmp.eq.s32.totalorder %s19, 1
      %p152 = por %p150, %p151
      %p153 = scmp.ne.s32.totalorder %s142, %s143
      %p154 = scmp.eq.s32.totalorder %s19, 0
      %p155 = por %p153, %p154
      %p156 = scmp.ne.s32.totalorder %s142, %s143
      %p157 = scmp.eq.s32.totalorder %s20, 1
      %p158 = por %p156, %p157
      %p160 = scmp.ne.s32.totalorder %s143, %s159
      %p161 = scmp.eq.s32.totalorder %s20, 0
      %p162 = por %p160, %p161
      %p163 = scmp.le.s32.totalorder 1, %s14
      %p164 = scmp.lt.s32.totalorder %s14, 3
      %p165 = pnand %p163, %p164
      %p166 = pneg %p165
      // Predicated region
      $region9: #{image_recover_loss.1} parent=5 // pred_check
        _
      $region10: #{image_recover_loss.1} parent=5 // pred_check_branch
        %168 = sbr.rel (%p165) target = $region12
      $region11: #{image_recover_loss.1} parent=5 // pred_region
        %s169 = ssub.s32 %s14, 1
        // Predicated region
        $region13: #{image_recover_loss.1} parent=11 // pred_check
          %p170 = pneg %p87
        $region14: #{image_recover_loss.1} parent=11 // pred_check_branch
          %172 = sbr.rel (%p170) target = $region16
        $region15: #{image_recover_loss.1} parent=11 // pred_region
          _
        $region16: #{image_recover_loss.1} parent=11 // pred_fallthru
          _
        // Predicated region
        $region17: #{image_recover_loss.1} parent=11 // pred_check
          %p173 = pneg %p108
        $region18: #{image_recover_loss.1} parent=11 // pred_check_branch
          %175 = sbr.rel (%p173) target = $region20
        $region19: #{image_recover_loss.1} parent=11 // pred_region
          _
        $region20: #{image_recover_loss.1} parent=11 // pred_fallthru
          _
        // Predicated region
        $region21: #{image_recover_loss.1} parent=11 // pred_check
          %p176 = pneg %p129
        $region22: #{image_recover_loss.1} parent=11 // pred_check_branch
          %178 = sbr.rel (%p176) target = $region24
        $region23: #{image_recover_loss.1} parent=11 // pred_region
          _
        $region24: #{image_recover_loss.1} parent=11 // pred_fallthru
          _
      $region12: #{image_recover_loss.1} parent=5 // pred_fallthru
        _
      %p179 = scmp.lt.s32.totalorder %s14, 2
      // Predicated region
      $region25: #{image_recover_loss.1} parent=5 // pred_check
        %p180 = pneg %p179
      $region26: #{image_recover_loss.1} parent=5 // pred_check_branch
        %182 = sbr.rel (%p180) target = $region28
      $region27: #{image_recover_loss.1} parent=5 // pred_region
        // Predicated region
        $region29: #{image_recover_loss.1} parent=27 // pred_check
          %p183 = pneg %p34
        $region30: #{image_recover_loss.1} parent=27 // pred_check_branch
          %185 = sbr.rel (%p183) target = $region32
        $region31: #{image_recover_loss.1} parent=27 // pred_region
          %p186 = scmp.lt.s32.totalorder %s14, 1
          %s187 = scalar_select %p186, %s14, 1
          %s188 = smul.addr %s187, 2
          %s189 = smul.addr %s188, 8
          %s190 = scalar_lea.vmem %s0, %s189
        $region32: #{image_recover_loss.1} parent=27 // pred_fallthru
          _
        // Predicated region
        $region33: #{image_recover_loss.1} parent=27 // pred_check
          %p191 = pneg %p60
        $region34: #{image_recover_loss.1} parent=27 // pred_check_branch
          %193 = sbr.rel (%p191) target = $region36
        $region35: #{image_recover_loss.1} parent=27 // pred_region
          %s194 = sand.u32 %s50, 1
          %s195 = scalar_lea.sflag [#allocation4], %s194
          %s196 = sand.u32 %s50, 1
          %s197 = smul.addr %s196, 16
          %s198 = scalar_lea.vmem [#allocation3], %s197
          %s200 = ssub.s32 256, 256
          %201 = vsyncadd %s195, %s200
          %s202 = smul.addr %s14, 2
          %s203 = smul.addr %s202, 128
          %s204 = scalar_lea.hbm %s1, %s203
          %s205 = sshll.u32 %s198, 4
          %s206 = int_to_ptr.vmem [resolvable:$true] %s205
          %211 = dma.hbm_to_vmem [thread:$0]  %s204, 256, %s206, %s195, 128, 128, 8
        $region36: #{image_recover_loss.1} parent=27 // pred_fallthru
          _
      $region28: #{image_recover_loss.1} parent=5 // pred_fallthru
        _
      %p212 = scmp.le.s32.totalorder 1, %s14
      %p213 = scmp.lt.s32.totalorder %s14, 3
      %p214 = pnand %p212, %p213
      %p215 = pneg %p214
      // Predicated region
      $region37: #{image_recover_loss.1} parent=5 // pred_check
        _
      $region38: #{image_recover_loss.1} parent=5 // pred_check_branch
        %217 = sbr.rel (%p214) target = $region40
      $region39: #{image_recover_loss.1} parent=5 // pred_region
        %s218 = ssub.s32 %s14, 1
        %s219 = sand.u32 %s53, 1
        %s220 = scalar_lea.sflag [#allocation4], %s219
        %s221 = sand.u32 %s53, 1
        %s222 = smul.addr %s221, 16
        %s223 = scalar_lea.vmem [#allocation3], %s222
        // Predicated region
        $region41: #{image_recover_loss.1} parent=39 // pred_check
          %p224 = pneg %p66
        $region42: #{image_recover_loss.1} parent=39 // pred_check_branch
          %226 = sbr.rel (%p224) target = $region44
        $region43: #{image_recover_loss.1} parent=39 // pred_region
          %227 = dma.done %s220, 256
        $region44: #{image_recover_loss.1} parent=39 // pred_fallthru
          _
        %p228 = scmp.lt.s32.totalorder %s19, 1
        %s229 = scalar_select %p228, %s19, 1
        %s230 = smul.addr %s229, 2
        %s231 = smul.addr %s230, 8
        %s232 = scalar_lea.vmem %s0, %s231
        %p233 = pneg %p40
        %p234 = pneg %p37
        %s235 = sand.u32 %s53, 1
        %s236 = scalar_lea.sflag [#allocation4], %s235
        %s237 = sand.u32 %s53, 1
        %s238 = smul.addr %s237, 16
        %s239 = scalar_lea.vmem [#allocation3], %s238
        %p240 = pneg %p66
        %p241 = pneg %p63
        %p242 = pneg %p87
        %p243 = pneg %p84
        %p244 = pneg %p108
        %p245 = pneg %p105
        %p246 = pneg %p129
        %p247 = pneg %p126
        %p248 = pneg %p155
        %p249 = pneg %p152
        %p250 = scmp.lt.s32.totalorder %s19, 1
        %s251 = scalar_select %p250, %s19, 1
        %s252 = scalar_lea.vmem %s5, %s251
        %p253 = scmp.lt.s32.totalorder %s19, 1
        %s254 = scalar_select %p253, %s19, 1
        %s255 = smul.addr %s254, 2
        %s256 = smul.addr %s255, 8
        %s257 = scalar_lea.vmem %s0, %s256
        %p258 = scmp.lt.s32.totalorder %s19, 1
        %s259 = scalar_select %p258, %s19, 1
        %s260 = scalar_lea.vmem %s5, %s259
        %v261 = vld [vmem:[%s257] sm:$0xff]
        %v262 = vld [vmem:[%s257 + $0x8] sm:$0xff]
        %v263 = vld [vmem:[%s223] sm:$0xff]
        %v264 = vld [vmem:[%s223 + $0x8] sm:$0xff]
        %v265 = vsub.f32 %v261, %v263
        %v266 = vsub.f32 %v262, %v264
        %v267 = vld [vmem:[%s2] sm:$0xf]
        %v268 = vld [vmem:[%s2 + $0x4] sm:$0xf]
        %v269 = vunpack.c.l.bf16 %v267
        %v270 = vunpack.c.l.bf16 %v268
        %vm271 = vcmask 130048
        %v273 = vsel %vm271, %v265, 0
        %v276 = vsel %vm271, %v266, 0
        %278 = vmatprep.subr.mxu0 0.0
        %279 = vmatpush1.msra.mxu0 %v269
        %280 = vmatprep.subr.mxu0 0.0
        %281 = vmatpush1.msra.mxu0 %v270
        %282 = vmatprep.subr.mxu0 0.0
        %283 = vmatpush1.msra.mxu0 0.0
        %284 = vmatprep.subr.mxu0 0.0
        %285 = vmatpush1.msra.mxu0 0.0
        %286 = vmatprep.subr.mxu0 0.0
        %287 = vmatpush1.msra.mxu0 0.0
        %288 = vmatprep.subr.mxu0 0.0
        %289 = vmatpush1.msra.mxu0 0.0
        %290 = vmatprep.subr.mxu0 0.0
        %291 = vmatpush1.msra.mxu0 0.0
        %292 = vmatprep.subr.mxu0 0.0
        %293 = vmatpush1.msra.mxu0 0.0
        %294 = vmatprep.subr.mxu0 0.0
        %295 = vmatpush1.msra.mxu0 0.0
        %296 = vmatprep.subr.mxu0 0.0
        %297 = vmatpush1.msra.mxu0 0.0
        %298 = vmatprep.subr.mxu0 0.0
        %299 = vmatpush1.msra.mxu0 0.0
        %300 = vmatprep.subr.mxu0 0.0
        %301 = vmatpush1.msra.mxu0 0.0
        %302 = vmatprep.subr.mxu0 0.0
        %303 = vmatpush1.msra.mxu0 0.0
        %304 = vmatprep.subr.mxu0 0.0
        %305 = vmatpush1.msra.mxu0 0.0
        %306 = vmatprep.subr.mxu0 0.0
        %307 = vmatpush1.msra.mxu0 0.0
        %308 = vmatprep.subr.mxu0 0.0
        %309 = vmatpush1.msra.mxu0 0.0
        %310 = vmatprep.subr.mxu0 0.0
        %311 = vmatpush1.msra.mxu0 0.0
        %312 = vmatprep.subr.mxu0 0.0
        %313 = vmatpush1.msra.mxu0 0.0
        %314 = vmatprep.subr.mxu0 0.0
        %315 = vmatpush1.msra.mxu0 0.0
        %316 = vmatprep.subr.mxu0 0.0
        %317 = vmatpush1.msra.mxu0 0.0
        %318 = vmatprep.subr.mxu0 0.0
        %319 = vmatpush1.msra.mxu0 0.0
        %320 = vmatprep.subr.mxu0 0.0
        %321 = vmatpush1.msra.mxu0 0.0
        %322 = vmatprep.subr.mxu0 0.0
        %323 = vmatpush1.msra.mxu0 0.0
        %324 = vmatprep.subr.mxu0 0.0
        %325 = vmatpush1.msra.mxu0 0.0
        %326 = vmatprep.subr.mxu0 0.0
        %327 = vmatpush1.msra.mxu0 0.0
        %328 = vmatprep.subr.mxu0 0.0
        %329 = vmatpush1.msra.mxu0 0.0
        %330 = vmatprep.subr.mxu0 0.0
        %331 = vmatpush1.msra.mxu0 0.0
        %332 = vmatprep.subr.mxu0 0.0
        %333 = vmatpush1.msra.mxu0 0.0
        %334 = vmatprep.subr.mxu0 0.0
        %335 = vmatpush1.msra.mxu0 0.0
        %336 = vmatprep.subr.mxu0 0.0
        %337 = vmatpush1.msra.mxu0 0.0
        %338 = vmatprep.subr.mxu0 0.0
        %339 = vmatpush1.msra.mxu0 0.0
        %340 = vmatprep.subr.mxu0 0.0
        %341 = vmatpush1.msra.mxu0 0.0
        %342 = vmatprep.mubr.f32.mxu0 0.0
        %343 = vmatmul.mubr.f32.gmra.mrb[0].mxu0 %v273
        %v344 = vpop.f32.mrb[0].mxu0
        %v345 = vadd.f32 0.0, %v344
        %v346 = vpop.f32.mrb[0].mxu0
        %347 = vmatprep.mubr.f32.mxu0 0.0
        %348 = vmatmul.mubr.f32.gmra.mrb[0].mxu0 %v276
        %v349 = vpop.f32.mrb[0].mxu0
        %v350 = vadd.f32 0.0, %v349
        %v351 = vpop.f32.mrb[0].mxu0
        %352 = vdwg.mxu0
        %vm353 = vcmask 64512
        %354 = vst.msk [vmem:[#allocation2] sm:$0xff] %vm353, %v345
        %355 = vst.msk [vmem:[#allocation2 + $0x8] sm:$0xff] %vm353, %v350
        %v356 = vld [vmem:[#allocation2] ss:$2 sm:$0xff]
        %s357 = scalar_lea.vmem [#allocation2], 1
        %v358 = vld [vmem:[%s357] ss:$2 sm:$0xff]
        %v359 = vadd.f32 %v356, %v358
        %v360 = vmul.f32 %v359, 0.5
        %v361 = vand.u32 2147483647, %v360
        %v362 = vsel %vm353, %v361, 0.0
        %363 = vadd.xlane.f32.xlu0 %v362
        %v364 = vpop.xlane.xlu0 %363
        %v365 = vrot.slane %v364, 4
        %v366 = vadd.f32 %v364, %v365
        %v367 = vrot.slane %v366, 2
        %v368 = vadd.f32 %v366, %v367
        %v369 = vrot.slane %v368, 1
        %v370 = vadd.f32 %v368, %v369
        %s371 = vtos %v370
        %s372 = smul.f32 %s371, 0.0046875
        %s373 = sadd.f32 %s372, 0.0
        %v374 = vld [vmem:[%s3] sm:$0xf]
        %v375 = vunpack.c.l.bf16 %v374
        %v377 = vsel %vm353, %v360, 0
        %379 = vmatprep.subr.mxu0 0.0
        %380 = vmatpush1.msra.mxu0 %v375
        %381 = vmatprep.subr.mxu0 0.0
        %382 = vmatpush1.msra.mxu0 0.0
        %383 = vmatprep.subr.mxu0 0.0
        %384 = vmatpush1.msra.mxu0 0.0
        %385 = vmatprep.subr.mxu0 0.0
        %386 = vmatpush1.msra.mxu0 0.0
        %387 = vmatprep.subr.mxu0 0.0
        %388 = vmatpush1.msra.mxu0 0.0
        %389 = vmatprep.subr.mxu0 0.0
        %390 = vmatpush1.msra.mxu0 0.0
        %391 = vmatprep.subr.mxu0 0.0
        %392 = vmatpush1.msra.mxu0 0.0
        %393 = vmatprep.subr.mxu0 0.0
        %394 = vmatpush1.msra.mxu0 0.0
        %395 = vmatprep.subr.mxu0 0.0
        %396 = vmatpush1.msra.mxu0 0.0
        %397 = vmatprep.subr.mxu0 0.0
        %398 = vmatpush1.msra.mxu0 0.0
        %399 = vmatprep.subr.mxu0 0.0
        %400 = vmatpush1.msra.mxu0 0.0
        %401 = vmatprep.subr.mxu0 0.0
        %402 = vmatpush1.msra.mxu0 0.0
        %403 = vmatprep.subr.mxu0 0.0
        %404 = vmatpush1.msra.mxu0 0.0
        %405 = vmatprep.subr.mxu0 0.0
        %406 = vmatpush1.msra.mxu0 0.0
        %407 = vmatprep.subr.mxu0 0.0
        %408 = vmatpush1.msra.mxu0 0.0
        %409 = vmatprep.subr.mxu0 0.0
        %410 = vmatpush1.msra.mxu0 0.0
        %411 = vmatprep.subr.mxu0 0.0
        %412 = vmatpush1.msra.mxu0 0.0
        %413 = vmatprep.subr.mxu0 0.0
        %414 = vmatpush1.msra.mxu0 0.0
        %415 = vmatprep.subr.mxu0 0.0
        %416 = vmatpush1.msra.mxu0 0.0
        %417 = vmatprep.subr.mxu0 0.0
        %418 = vmatpush1.msra.mxu0 0.0
        %419 = vmatprep.subr.mxu0 0.0
        %420 = vmatpush1.msra.mxu0 0.0
        %421 = vmatprep.subr.mxu0 0.0
        %422 = vmatpush1.msra.mxu0 0.0
        %423 = vmatprep.subr.mxu0 0.0
        %424 = vmatpush1.msra.mxu0 0.0
        %425 = vmatprep.subr.mxu0 0.0
        %426 = vmatpush1.msra.mxu0 0.0
        %427 = vmatprep.subr.mxu0 0.0
        %428 = vmatpush1.msra.mxu0 0.0
        %429 = vmatprep.subr.mxu0 0.0
        %430 = vmatpush1.msra.mxu0 0.0
        %431 = vmatprep.subr.mxu0 0.0
        %432 = vmatpush1.msra.mxu0 0.0
        %433 = vmatprep.subr.mxu0 0.0
        %434 = vmatpush1.msra.mxu0 0.0
        %435 = vmatprep.subr.mxu0 0.0
        %436 = vmatpush1.msra.mxu0 0.0
        %437 = vmatprep.subr.mxu0 0.0
        %438 = vmatpush1.msra.mxu0 0.0
        %439 = vmatprep.subr.mxu0 0.0
        %440 = vmatpush1.msra.mxu0 0.0
        %441 = vmatprep.subr.mxu0 0.0
        %442 = vmatpush1.msra.mxu0 0.0
        %443 = vmatprep.mubr.f32.mxu0 0.0
        %444 = vmatmul.mubr.f32.gmra.mrb[0].mxu0 %v377
        %v445 = vpop.f32.mrb[0].mxu0
        %v446 = vadd.f32 0.0, %v445
        %v447 = vpop.f32.mrb[0].mxu0
        %448 = vdwg.mxu0
        %vm449 = vcmask 31744
        %450 = vst.msk [vmem:[#allocation2] sm:$0xff] %vm449, %v446
        %v451 = vld [vmem:[#allocation2] ss:$2 sm:$0xf]
        %v452 = vld [vmem:[%s357] ss:$2 sm:$0xf]
        %v453 = vadd.f32 %v451, %v452
        %v454 = vmul.f32 %v453, 0.5
        %v455 = vand.u32 2147483647, %v454
        %vm456 = vcmask 27648
        %v457 = vsel %vm456, %v455, 0.0
        %458 = vadd.xlane.f32.xlu0 %v457
        %v459 = vpop.xlane.xlu0 %458
        %v460 = vrot.slane %v459, 4
        %v461 = vadd.f32 %v459, %v460
        %v462 = vrot.slane %v461, 2
        %v463 = vadd.f32 %v461, %v462
        %v464 = vrot.slane %v463, 1
        %v465 = vadd.f32 %v463, %v464
        %s466 = vtos %v465
        %s467 = smul.f32 %s466, 0.009375
        %s468 = sadd.f32 %s373, %s467
        %v469 = vld [vmem:[%s4] sm:$0x3]
        %v470 = vunpack.c.l.bf16 %v469
        %v472 = vsel %vm449, %v454, 0
        %vm474 = vcmask 1043456
        %v476 = vsel %vm474, %v470, 0
        %478 = vmatprep.subr.mxu0 0.0
        %479 = vmatpush1.msra.mxu0 %v476
        %480 = vmatprep.subr.mxu0 0.0
        %481 = vmatpush1.msra.mxu0 0.0
        %482 = vmatprep.subr.mxu0 0.0
        %483 = vmatpush1.msra.mxu0 0.0
        %484 = vmatprep.subr.mxu0 0.0
        %485 = vmatpush1.msra.mxu0 0.0
        %486 = vmatprep.subr.mxu0 0.0
        %487 = vmatpush1.msra.mxu0 0.0
        %488 = vmatprep.subr.mxu0 0.0
        %489 = vmatpush1.msra.mxu0 0.0
        %490 = vmatprep.subr.mxu0 0.0
        %491 = vmatpush1.msra.mxu0 0.0
        %492 = vmatprep.subr.mxu0 0.0
        %493 = vmatpush1.msra.mxu0 0.0
        %494 = vmatprep.subr.mxu0 0.0
        %495 = vmatpush1.msra.mxu0 0.0
        %496 = vmatprep.subr.mxu0 0.0
        %497 = vmatpush1.msra.mxu0 0.0
        %498 = vmatprep.subr.mxu0 0.0
        %499 = vmatpush1.msra.mxu0 0.0
        %500 = vmatprep.subr.mxu0 0.0
        %501 = vmatpush1.msra.mxu0 0.0
        %502 = vmatprep.subr.mxu0 0.0
        %503 = vmatpush1.msra.mxu0 0.0
        %504 = vmatprep.subr.mxu0 0.0
        %505 = vmatpush1.msra.mxu0 0.0
        %506 = vmatprep.subr.mxu0 0.0
        %507 = vmatpush1.msra.mxu0 0.0
        %508 = vmatprep.subr.mxu0 0.0
        %509 = vmatpush1.msra.mxu0 0.0
        %510 = vmatprep.subr.mxu0 0.0
        %511 = vmatpush1.msra.mxu0 0.0
        %512 = vmatprep.subr.mxu0 0.0
        %513 = vmatpush1.msra.mxu0 0.0
        %514 = vmatprep.subr.mxu0 0.0
        %515 = vmatpush1.msra.mxu0 0.0
        %516 = vmatprep.subr.mxu0 0.0
        %517 = vmatpush1.msra.mxu0 0.0
        %518 = vmatprep.subr.mxu0 0.0
        %519 = vmatpush1.msra.mxu0 0.0
        %520 = vmatprep.subr.mxu0 0.0
        %521 = vmatpush1.msra.mxu0 0.0
        %522 = vmatprep.subr.mxu0 0.0
        %523 = vmatpush1.msra.mxu0 0.0
        %524 = vmatprep.subr.mxu0 0.0
        %525 = vmatpush1.msra.mxu0 0.0
        %526 = vmatprep.subr.mxu0 0.0
        %527 = vmatpush1.msra.mxu0 0.0
        %528 = vmatprep.subr.mxu0 0.0
        %529 = vmatpush1.msra.mxu0 0.0
        %530 = vmatprep.subr.mxu0 0.0
        %531 = vmatpush1.msra.mxu0 0.0
        %532 = vmatprep.subr.mxu0 0.0
        %533 = vmatpush1.msra.mxu0 0.0
        %534 = vmatprep.subr.mxu0 0.0
        %535 = vmatpush1.msra.mxu0 0.0
        %536 = vmatprep.subr.mxu0 0.0
        %537 = vmatpush1.msra.mxu0 0.0
        %538 = vmatprep.subr.mxu0 0.0
        %539 = vmatpush1.msra.mxu0 0.0
        %540 = vmatprep.subr.mxu0 0.0
        %541 = vmatpush1.msra.mxu0 0.0
        %542 = vmatprep.mubr.f32.mxu0 0.0
        %543 = vmatmul.mubr.f32.gmra.mrb[0].mxu0 %v472
        %v544 = vpop.f32.mrb[0].mxu0
        %v545 = vadd.f32 0.0, %v544
        %v546 = vpop.f32.mrb[0].mxu0
        %547 = vdwg.mxu0
        %vm548 = vcmask 11264
        %549 = vst.msk [vmem:[#allocation2] sm:$0xf] %vm548, %v545
        %v550 = vld [vmem:[#allocation2] ss:$2 sm:$0x3]
        %v551 = vld [vmem:[%s357] ss:$2 sm:$0x3]
        %v552 = vadd.f32 %v550, %v551
        %v553 = vmul.f32 %v552, 0.5
        %v554 = vand.u32 2147483647, %v553
        %vm555 = vcmask 9216
        %v556 = vsel %vm555, %v554, 0.0
        %557 = vadd.xlane.f32.xlu0 %v556
        %v558 = vpop.xlane.xlu0 %557
        %v559 = vrot.slane %v558, 4
        %v560 = vadd.f32 %v558, %v559
        %v561 = vrot.slane %v560, 2
        %v562 = vadd.f32 %v560, %v561
        %v563 = vrot.slane %v562, 1
        %v564 = vadd.f32 %v562, %v563
        %s565 = vtos %v564
        %s566 = smul.f32 %s565, 0.0125
        %s567 = sadd.f32 %s468, %s566
        %v568 = vstv %s567
        %569 = vst [vmem:[%s260] sm:$0x1] %v568
        %p570 = scmp.lt.s32.totalorder %s19, 1
        %s571 = scalar_select %p570, %s19, 1
        %s572 = scalar_lea.vmem %s5, %s571
        // Predicated region
        $region45: #{image_recover_loss.1} parent=39 // pred_check
          %p573 = pneg %p152
        $region46: #{image_recover_loss.1} parent=39 // pred_check_branch
          %575 = sbr.rel (%p573) target = $region48
        $region47: #{image_recover_loss.1} parent=39 // pred_region
          _
        $region48: #{image_recover_loss.1} parent=39 // pred_fallthru
          _
      $region40: #{image_recover_loss.1} parent=5 // pred_fallthru
        _
      %p576 = scmp.le.s32.totalorder 2, %s14
      // Predicated region
      $region49: #{image_recover_loss.1} parent=5 // pred_check
        %p577 = pneg %p576
      $region50: #{image_recover_loss.1} parent=5 // pred_check_branch
        %579 = sbr.rel (%p577) target = $region52
      $region51: #{image_recover_loss.1} parent=5 // pred_region
        %s580 = ssub.s32 %s14, 2
        // Predicated region
        $region53: #{image_recover_loss.1} parent=51 // pred_check
          %p581 = pneg %p158
        $region54: #{image_recover_loss.1} parent=51 // pred_check_branch
          %583 = sbr.rel (%p581) target = $region56
        $region55: #{image_recover_loss.1} parent=51 // pred_region
          %p584 = scmp.lt.s32.totalorder %s20, 1
          %s585 = scalar_select %p584, %s20, 1
          %s586 = scalar_lea.vmem %s5, %s585
        $region56: #{image_recover_loss.1} parent=51 // pred_fallthru
          _
      $region52: #{image_recover_loss.1} parent=5 // pred_fallthru
        _
    $region6: #{image_recover_loss.1} parent=1 // loop_footer
      %s18 = sadd.s32 1, %s14
    $region7: #{image_recover_loss.1} parent=1 // loop_footer_branch
      %13 = sbr.rel target = $region3
    $region8: #{image_recover_loss.1} parent=1 // loop_exit
      _
    %587 = vsyncpa [#allocation4], 1
    %s588 = scalar_lea.sflag [#allocation4], 1
    %589 = vsyncpa %s588, 1

</llo_original>
